<compile_context>
chip_gen: v5e
topology: v5e:2x2
jax: 0.10.0
libtpu: 0.0.40
codegen_flags: <defaults>
</compile_context>

<pallas_src>
import jax
import jax.numpy as jnp
from jax.experimental import pallas as pl
from jax.experimental.pallas import tpu as pltpu

EPS = 1e-5
LANE = 128


def _round_up(n, m=LANE):
    return ((n + m - 1) // m) * m


def make_fused_mlp_kernel(n_hidden):
    """Builds a kernel fusing n_hidden [Linear->ReLU->BN] layers + the final Linear."""

    def kernel(*refs):
        # refs layout:
        #   x_ref,
        #   (w, b, gamma, beta) * n_hidden,
        #   w_out, b_out,
        #   o_ref
        x_ref = refs[0]
        idx = 1
        h = x_ref[...]                                    # [B, F_pad] f32, stays in VMEM
        for _ in range(n_hidden):
            w_ref, b_ref, g_ref, be_ref = refs[idx:idx + 4]
            idx += 4
            # Linear + ReLU (MXU matmul, f32 accumulate)
            z = jnp.dot(h, w_ref[...], preferred_element_type=jnp.float32)
            z = jnp.maximum(z + b_ref[...], 0.0)
            # BatchNorm1d (training mode): per-feature stats over the batch axis.
            mean = jnp.mean(z, axis=0, keepdims=True)     # [1, F]
            c = z - mean                                  # centered once, reused
            var = jnp.mean(c * c, axis=0, keepdims=True)  # biased variance, [1, F]
            # Fold gamma into the normalization scale on the [1, F] row, then one
            # broadcast multiply + add over the [B, F] tile.
            scale = g_ref[...] * jax.lax.rsqrt(var + EPS)  # [1, F]
            h = c * scale + be_ref[...]
        w_out_ref, b_out_ref = refs[idx], refs[idx + 1]
        o_ref = refs[idx + 2]
        # Final Linear; weight is lane-padded to 128 cols (only col 0 is real), so this
        # is a full, unmasked [B, 128] vreg store.
        o_ref[...] = (
            jnp.dot(h, w_out_ref[...], preferred_element_type=jnp.float32)
            + b_out_ref[...]
        )

    return kernel


def nnmodel_forward(x, hidden_params, out_params):
    """Fused forward pass.  x: [B, F_in] f32; params in unpadded PyTorch-equivalent shapes."""
    B, F_in = x.shape
    F_in_pad = _round_up(F_in)

    # ---- lane-pad everything to multiples of 128 on the feature axes ----
    x_pad = jnp.zeros((B, F_in_pad), jnp.float32).at[:, :F_in].set(x)

    flat_inputs = [x_pad]
    prev_pad = F_in_pad
    for (w, b, gamma, beta) in hidden_params:
        fi, fo = w.shape
        fo_pad = _round_up(fo)
        w_p = jnp.zeros((prev_pad, fo_pad), jnp.float32).at[:fi, :fo].set(w)
        b_p = jnp.zeros((1, fo_pad), jnp.float32).at[:, :fo].set(b)
        g_p = jnp.zeros((1, fo_pad), jnp.float32).at[:, :fo].set(gamma)
        be_p = jnp.zeros((1, fo_pad), jnp.float32).at[:, :fo].set(beta)
        flat_inputs += [w_p, b_p, g_p, be_p]
        prev_pad = fo_pad

    w_out, b_out = out_params
    fi, fo = w_out.shape            # fo == 1
    fo_pad = _round_up(fo)          # -> 128
    w_out_p = jnp.zeros((prev_pad, fo_pad), jnp.float32).at[:fi, :fo].set(w_out)
    b_out_p = jnp.zeros((1, fo_pad), jnp.float32).at[:, :fo].set(b_out)
    flat_inputs += [w_out_p, b_out_p]

    # Full-array blocks (block_shape == array shape) -> single resident VMEM tile each.
    in_specs = [pl.BlockSpec(a.shape, lambda: (0, 0)) for a in flat_inputs]
    kernel = make_fused_mlp_kernel(len(hidden_params))

    out_pad = pl.pallas_call(
        kernel,
        out_shape=jax.ShapeDtypeStruct((B, fo_pad), jnp.float32),
        in_specs=in_specs,
        out_specs=pl.BlockSpec((B, fo_pad), lambda: (0, 0)),
        grid=(),
        compiler_params=pltpu.CompilerParams(vmem_limit_bytes=64 << 20),
    )(*flat_inputs)

    return out_pad[:, :fo]          # slice the single real output column


# ------------------------- parameter init & reference -------------------------

def init_params(key, input_shape, neurons):
    """Deterministic init mimicking PyTorch Linear default U(-1/sqrt(fan_in), +)."""
    params = []
    dims = [input_shape] + list(neurons)
    for i in range(len(neurons)):
        fan_in, fan_out = dims[i], dims[i + 1]
        key, k_w, k_b = jax.random.split(key, 3)
        bound = 1.0 / jnp.sqrt(fan_in)
        w = jax.random.uniform(k_w, (fan_in, fan_out), jnp.float32, -bound, bound)
        b = jax.random.uniform(k_b, (1, fan_out), jnp.float32, -bound, bound)
        gamma = jnp.ones((1, fan_out), jnp.float32)   # BN default weight
        beta = jnp.zeros((1, fan_out), jnp.float32)   # BN default bias
        params.append((w, b, gamma, beta))
    fan_in = neurons[-1]
    key, k_w, k_b = jax.random.split(key, 3)
    bound = 1.0 / jnp.sqrt(fan_in)
    w_out = jax.random.uniform(k_w, (fan_in, 1), jnp.float32, -bound, bound)
    b_out = jax.random.uniform(k_b, (1, 1), jnp.float32, -bound, bound)
    return params, (w_out, b_out)


def nnmodel_reference(x, hidden_params, out_params):
    """Pure-JAX reference (unpadded) for correctness checking."""
    for (w, b, gamma, beta) in hidden_params:
        h = jnp.maximum(x @ w + b, 0.0)
        mean = jnp.mean(h, axis=0, keepdims=True)
        var = jnp.mean((h - mean) ** 2, axis=0, keepdims=True)
        x = gamma * (h - mean) / jnp.sqrt(var + EPS) + beta
    w_out, b_out = out_params
    return x @ w_out + b_out


if __name__ == "__main__":
    key = jax.random.PRNGKey(0)
    batch = 8
    input_shape = 16
    neurons = [32, 32]   # n_layers = 2

    key, k_x, k_p = jax.random.split(key, 3)
    x = jax.random.normal(k_x, (batch, input_shape), jnp.float32)
    hidden_params, out_params = init_params(k_p, input_shape, neurons)

    out = nnmodel_forward(x, hidden_params, out_params)
    out = jax.block_until_ready(out)

    ref = nnmodel_reference(x, hidden_params, out_params)
    assert out.shape == (batch, 1), out.shape
    assert jnp.allclose(out, ref, atol=1e-4, rtol=1e-4), (out, ref)

    print("KERNEL_OK")
</pallas_src>

<mosaic_0001>
module attributes {stable_mosaic.version = 11 : i64} {
  func.func @kernel(%arg0: memref<8x128xf32, #tpu.memory_space<vmem>>, %arg1: memref<128x128xf32, #tpu.memory_space<vmem>>, %arg2: memref<1x128xf32, #tpu.memory_space<vmem>>, %arg3: memref<1x128xf32, #tpu.memory_space<vmem>>, %arg4: memref<1x128xf32, #tpu.memory_space<vmem>>, %arg5: memref<128x128xf32, #tpu.memory_space<vmem>>, %arg6: memref<1x128xf32, #tpu.memory_space<vmem>>, %arg7: memref<1x128xf32, #tpu.memory_space<vmem>>, %arg8: memref<1x128xf32, #tpu.memory_space<vmem>>, %arg9: memref<128x128xf32, #tpu.memory_space<vmem>>, %arg10: memref<1x128xf32, #tpu.memory_space<vmem>>, %arg11: memref<8x128xf32, #tpu.memory_space<vmem>>) attributes {dimension_semantics = [], scalar_prefetch = 0 : i64, scratch_operands = 0 : i64, tpu.core_type = #tpu.core_type<tc>} {
    %c0 = arith.constant 0 : index
    %c0_0 = arith.constant 0 : index
    %0 = vector.load %arg0[%c0, %c0_0] : memref<8x128xf32, #tpu.memory_space<vmem>>, vector<8x128xf32>
    %c0_1 = arith.constant 0 : index
    %c0_2 = arith.constant 0 : index
    %1 = vector.load %arg1[%c0_1, %c0_2] : memref<128x128xf32, #tpu.memory_space<vmem>>, vector<128x128xf32>
    %cst = arith.constant dense<0.000000e+00> : vector<8x128xf32>
    %2 = tpu.matmul %0, %1, %cst {dimension_numbers = #tpu.dot_dimension_numbers<[1], [0], [0], [1], [0, 0, 1, 1], [], []>} : vector<8x128xf32>, vector<128x128xf32>, vector<8x128xf32> -> vector<8x128xf32>
    %c0_3 = arith.constant 0 : index
    %c0_4 = arith.constant 0 : index
    %3 = vector.load %arg2[%c0_3, %c0_4] : memref<1x128xf32, #tpu.memory_space<vmem>>, vector<1x128xf32>
    %4 = vector.broadcast %3 : vector<1x128xf32> to vector<8x128xf32>
    %5 = arith.addf %2, %4 : vector<8x128xf32>
    %cst_5 = arith.constant 0.000000e+00 : f32
    %6 = vector.broadcast %cst_5 : f32 to vector<8x128xf32>
    %7 = arith.maximumf %5, %6 : vector<8x128xf32>
    %cst_6 = arith.constant dense<0.000000e+00> : vector<128xf32>
    %8 = vector.multi_reduction <add>, %7, %cst_6 [0] : vector<8x128xf32> to vector<128xf32>
    %9 = vector.shape_cast %8 : vector<128xf32> to vector<1x128xf32>
    %cst_7 = arith.constant 8.000000e+00 : f32
    %10 = vector.broadcast %cst_7 : f32 to vector<1x128xf32>
    %11 = arith.divf %9, %10 : vector<1x128xf32>
    %12 = vector.broadcast %11 : vector<1x128xf32> to vector<8x128xf32>
    %13 = arith.subf %7, %12 : vector<8x128xf32>
    %14 = arith.mulf %13, %13 : vector<8x128xf32>
    %cst_8 = arith.constant dense<0.000000e+00> : vector<128xf32>
    %15 = vector.multi_reduction <add>, %14, %cst_8 [0] : vector<8x128xf32> to vector<128xf32>
    %16 = vector.shape_cast %15 : vector<128xf32> to vector<1x128xf32>
    %cst_9 = arith.constant 8.000000e+00 : f32
    %17 = vector.broadcast %cst_9 : f32 to vector<1x128xf32>
    %18 = arith.divf %16, %17 : vector<1x128xf32>
    %c0_10 = arith.constant 0 : index
    %c0_11 = arith.constant 0 : index
    %19 = vector.load %arg3[%c0_10, %c0_11] : memref<1x128xf32, #tpu.memory_space<vmem>>, vector<1x128xf32>
    %cst_12 = arith.constant 9.99999974E-6 : f32
    %20 = vector.broadcast %cst_12 : f32 to vector<1x128xf32>
    %21 = arith.addf %18, %20 : vector<1x128xf32>
    %22 = math.rsqrt %21 : vector<1x128xf32>
    %23 = arith.mulf %19, %22 : vector<1x128xf32>
    %24 = vector.broadcast %23 : vector<1x128xf32> to vector<8x128xf32>
    %25 = arith.mulf %13, %24 : vector<8x128xf32>
    %c0_13 = arith.constant 0 : index
    %c0_14 = arith.constant 0 : index
    %26 = vector.load %arg4[%c0_13, %c0_14] : memref<1x128xf32, #tpu.memory_space<vmem>>, vector<1x128xf32>
    %27 = vector.broadcast %26 : vector<1x128xf32> to vector<8x128xf32>
    %28 = arith.addf %25, %27 : vector<8x128xf32>
    %c0_15 = arith.constant 0 : index
    %c0_16 = arith.constant 0 : index
    %29 = vector.load %arg5[%c0_15, %c0_16] : memref<128x128xf32, #tpu.memory_space<vmem>>, vector<128x128xf32>
    %cst_17 = arith.constant dense<0.000000e+00> : vector<8x128xf32>
    %30 = tpu.matmul %28, %29, %cst_17 {dimension_numbers = #tpu.dot_dimension_numbers<[1], [0], [0], [1], [0, 0, 1, 1], [], []>} : vector<8x128xf32>, vector<128x128xf32>, vector<8x128xf32> -> vector<8x128xf32>
    %c0_18 = arith.constant 0 : index
    %c0_19 = arith.constant 0 : index
    %31 = vector.load %arg6[%c0_18, %c0_19] : memref<1x128xf32, #tpu.memory_space<vmem>>, vector<1x128xf32>
    %32 = vector.broadcast %31 : vector<1x128xf32> to vector<8x128xf32>
    %33 = arith.addf %30, %32 : vector<8x128xf32>
    %cst_20 = arith.constant 0.000000e+00 : f32
    %34 = vector.broadcast %cst_20 : f32 to vector<8x128xf32>
    %35 = arith.maximumf %33, %34 : vector<8x128xf32>
    %cst_21 = arith.constant dense<0.000000e+00> : vector<128xf32>
    %36 = vector.multi_reduction <add>, %35, %cst_21 [0] : vector<8x128xf32> to vector<128xf32>
    %37 = vector.shape_cast %36 : vector<128xf32> to vector<1x128xf32>
    %cst_22 = arith.constant 8.000000e+00 : f32
    %38 = vector.broadcast %cst_22 : f32 to vector<1x128xf32>
    %39 = arith.divf %37, %38 : vector<1x128xf32>
    %40 = vector.broadcast %39 : vector<1x128xf32> to vector<8x128xf32>
    %41 = arith.subf %35, %40 : vector<8x128xf32>
    %42 = arith.mulf %41, %41 : vector<8x128xf32>
    %cst_23 = arith.constant dense<0.000000e+00> : vector<128xf32>
    %43 = vector.multi_reduction <add>, %42, %cst_23 [0] : vector<8x128xf32> to vector<128xf32>
    %44 = vector.shape_cast %43 : vector<128xf32> to vector<1x128xf32>
    %cst_24 = arith.constant 8.000000e+00 : f32
    %45 = vector.broadcast %cst_24 : f32 to vector<1x128xf32>
    %46 = arith.divf %44, %45 : vector<1x128xf32>
    %c0_25 = arith.constant 0 : index
    %c0_26 = arith.constant 0 : index
    %47 = vector.load %arg7[%c0_25, %c0_26] : memref<1x128xf32, #tpu.memory_space<vmem>>, vector<1x128xf32>
    %cst_27 = arith.constant 9.99999974E-6 : f32
    %48 = vector.broadcast %cst_27 : f32 to vector<1x128xf32>
    %49 = arith.addf %46, %48 : vector<1x128xf32>
    %50 = math.rsqrt %49 : vector<1x128xf32>
    %51 = arith.mulf %47, %50 : vector<1x128xf32>
    %52 = vector.broadcast %51 : vector<1x128xf32> to vector<8x128xf32>
    %53 = arith.mulf %41, %52 : vector<8x128xf32>
    %c0_28 = arith.constant 0 : index
    %c0_29 = arith.constant 0 : index
    %54 = vector.load %arg8[%c0_28, %c0_29] : memref<1x128xf32, #tpu.memory_space<vmem>>, vector<1x128xf32>
    %55 = vector.broadcast %54 : vector<1x128xf32> to vector<8x128xf32>
    %56 = arith.addf %53, %55 : vector<8x128xf32>
    %c0_30 = arith.constant 0 : index
    %c0_31 = arith.constant 0 : index
    %57 = vector.load %arg9[%c0_30, %c0_31] : memref<128x128xf32, #tpu.memory_space<vmem>>, vector<128x128xf32>
    %cst_32 = arith.constant dense<0.000000e+00> : vector<8x128xf32>
    %58 = tpu.matmul %56, %57, %cst_32 {dimension_numbers = #tpu.dot_dimension_numbers<[1], [0], [0], [1], [0, 0, 1, 1], [], []>} : vector<8x128xf32>, vector<128x128xf32>, vector<8x128xf32> -> vector<8x128xf32>
    %c0_33 = arith.constant 0 : index
    %c0_34 = arith.constant 0 : index
    %59 = vector.load %arg10[%c0_33, %c0_34] : memref<1x128xf32, #tpu.memory_space<vmem>>, vector<1x128xf32>
    %60 = vector.broadcast %59 : vector<1x128xf32> to vector<8x128xf32>
    %61 = arith.addf %58, %60 : vector<8x128xf32>
    %c0_35 = arith.constant 0 : index
    %c0_36 = arith.constant 0 : index
    %62 = vector.load %arg11[%c0_35, %c0_36] : memref<8x128xf32, #tpu.memory_space<vmem>>, vector<8x128xf32>
    tpu.vector_store %arg11[%c0_35, %c0_36], %61 {strides = array<i32>} : memref<8x128xf32, #tpu.memory_space<vmem>>, vector<8x128xf32>,
    return
  }
}

</mosaic_0001>

<llo_original>
// kernel: tpu_custom_call.1
$region0: #{tpu_custom_call.1}
  #allocation0 [shape = 'u32[]', space=smem, size = 0x4, offset = 0x4, fixed_abs, tag = 'smem constant byte address 0x4 - core index']
  #allocation1 [shape = 'u32[72,128]{1,0:T(1,128)}', space=vmem, size = 0x9000, scoped, tag = 'internal scratch']
  %s0 = inlined_call_operand.hbm [shape: f32[8,128], index: 0, kind: input, shape index: {}]
  %s1 = inlined_call_operand.hbm [shape: f32[128,128], index: 1, kind: input, shape index: {}]
  %s2 = inlined_call_operand.vmem [shape: f32[1,128], index: 2, kind: input, shape index: {}]
  %s3 = inlined_call_operand.vmem [shape: f32[1,128], index: 3, kind: input, shape index: {}]
  %s4 = inlined_call_operand.vmem [shape: f32[1,128], index: 4, kind: input, shape index: {}]
  %s5 = inlined_call_operand.hbm [shape: f32[128,128], index: 5, kind: input, shape index: {}]
  %s6 = inlined_call_operand.vmem [shape: f32[1,128], index: 6, kind: input, shape index: {}]
  %s7 = inlined_call_operand.vmem [shape: f32[1,128], index: 7, kind: input, shape index: {}]
  %s8 = inlined_call_operand.vmem [shape: f32[1,128], index: 8, kind: input, shape index: {}]
  %s9 = inlined_call_operand.hbm [shape: f32[128,128], index: 9, kind: input, shape index: {}]
  %s10 = inlined_call_operand.vmem [shape: f32[1,128], index: 10, kind: input, shape index: {}]
  %s11 = inlined_call_operand.hbm [shape: f32[8,128], index: 11, kind: output, shape index: {}]
  %s12 = sld [smem:[#allocation0]]
  $region70: #{tpu_custom_call.1} parent=0
    _
  %s14 = ssub.s32 1, %s12
  %s15 = scalar_select 0, %s14, %s12
  $region1: #{tpu_custom_call.1} parent=0
    #allocation2 [shape = 'u8[4096]{0}', space=vmem, size = 0x1000, scoped, tag = 'input window, operand 0, single buffered']
    #allocation3 [shape = 's32[1]{0}', space=sflag, size = 0x4, scoped, tag = 'scoped memory for tpu_custom_call.1']
    #allocation4 [shape = 's32[1]{0}', space=sflag, size = 0x4, scoped, tag = 'scoped memory for tpu_custom_call.1']
    #allocation5 [shape = 'u8[65536]{0}', space=vmem, size = 0x10000, scoped, tag = 'input window, operand 1, single buffered']
    #allocation6 [shape = 's32[1]{0}', space=sflag, size = 0x4, scoped, tag = 'scoped memory for tpu_custom_call.1']
    #allocation7 [shape = 'u8[65536]{0}', space=vmem, size = 0x10000, scoped, tag = 'input window, operand 5, single buffered']
    #allocation8 [shape = 'u8[65536]{0}', space=vmem, size = 0x10000, scoped, tag = 'input window, operand 9, single buffered']
    #allocation9 [shape = 's32[1]{0}', space=sflag, size = 0x4, scoped, tag = 'scoped memory for tpu_custom_call.1']
    #allocation10 [shape = 'u8[4096]{0}', space=vmem, size = 0x1000, scoped, tag = 'output window, operand 0, single buffered']
    %16 = vsyncpa [#allocation3], 0
    %17 = vsyncpa [#allocation6], 0
    %18 = vsyncpa [#allocation9], 0
    %19 = vsyncpa [#allocation4], 0
    // Predicated region
    $region2: #{tpu_custom_call.1} parent=1 // pred_check
      _
    $region3: #{tpu_custom_call.1} parent=1 // pred_check_branch
      %21 = sbr.rel (0) target = $region5
    $region4: #{tpu_custom_call.1} parent=1 // pred_region
      %23 = vsyncadd [#allocation3], 0
      %s25 = sshll.u32 %s0, 4
      %s26 = int_to_ptr.hbm [resolvable:$true] %s25
      %s27 = sshll.u32 [#allocation2], 4
      %s28 = int_to_ptr.vmem [resolvable:$true] %s27
      %30 = dma.hbm_to_vmem [thread:$0]  %s26, 128, %s28, [#allocation3]
    $region5: #{tpu_custom_call.1} parent=1 // pred_fallthru
      _
    // Predicated region
    $region6: #{tpu_custom_call.1} parent=1 // pred_check
      _
    $region7: #{tpu_custom_call.1} parent=1 // pred_check_branch
      %32 = sbr.rel (0) target = $region9
    $region8: #{tpu_custom_call.1} parent=1 // pred_region
      %34 = vsyncadd [#allocation6], 0
      %s35 = sshll.u32 %s1, 4
      %s36 = int_to_ptr.hbm [resolvable:$true] %s35
      %s37 = sshll.u32 [#allocation5], 4
      %s38 = int_to_ptr.vmem [resolvable:$true] %s37
      %43 = dma.hbm_to_vmem [thread:$0]  %s36, 2048, %s38, [#allocation6], 128, 128, 8
    $region9: #{tpu_custom_call.1} parent=1 // pred_fallthru
      _
    // Predicated region
    $region10: #{tpu_custom_call.1} parent=1 // pred_check
      _
    $region11: #{tpu_custom_call.1} parent=1 // pred_check_branch
      %45 = sbr.rel (0) target = $region13
    $region12: #{tpu_custom_call.1} parent=1 // pred_region
      _
    $region13: #{tpu_custom_call.1} parent=1 // pred_fallthru
      _
    // Predicated region
    $region14: #{tpu_custom_call.1} parent=1 // pred_check
      _
    $region15: #{tpu_custom_call.1} parent=1 // pred_check_branch
      %47 = sbr.rel (0) target = $region17
    $region16: #{tpu_custom_call.1} parent=1 // pred_region
      _
    $region17: #{tpu_custom_call.1} parent=1 // pred_fallthru
      _
    // Predicated region
    $region18: #{tpu_custom_call.1} parent=1 // pred_check
      _
    $region19: #{tpu_custom_call.1} parent=1 // pred_check_branch
      %49 = sbr.rel (0) target = $region21
    $region20: #{tpu_custom_call.1} parent=1 // pred_region
      _
    $region21: #{tpu_custom_call.1} parent=1 // pred_fallthru
      _
    // Predicated region
    $region22: #{tpu_custom_call.1} parent=1 // pred_check
      _
    $region23: #{tpu_custom_call.1} parent=1 // pred_check_branch
      %51 = sbr.rel (0) target = $region25
    $region24: #{tpu_custom_call.1} parent=1 // pred_region
      %53 = vsyncadd [#allocation6], 0
      %s54 = sshll.u32 %s5, 4
      %s55 = int_to_ptr.hbm [resolvable:$true] %s54
      %s56 = sshll.u32 [#allocation7], 4
      %s57 = int_to_ptr.vmem [resolvable:$true] %s56
      %62 = dma.hbm_to_vmem [thread:$0]  %s55, 2048, %s57, [#allocation6], 128, 128, 8
    $region25: #{tpu_custom_call.1} parent=1 // pred_fallthru
      _
    // Predicated region
    $region26: #{tpu_custom_call.1} parent=1 // pred_check
      _
    $region27: #{tpu_custom_call.1} parent=1 // pred_check_branch
      %64 = sbr.rel (0) target = $region29
    $region28: #{tpu_custom_call.1} parent=1 // pred_region
      _
    $region29: #{tpu_custom_call.1} parent=1 // pred_fallthru
      _
    // Predicated region
    $region30: #{tpu_custom_call.1} parent=1 // pred_check
      _
    $region31: #{tpu_custom_call.1} parent=1 // pred_check_branch
      %66 = sbr.rel (0) target = $region33
    $region32: #{tpu_custom_call.1} parent=1 // pred_region
      _
    $region33: #{tpu_custom_call.1} parent=1 // pred_fallthru
      _
    // Predicated region
    $region34: #{tpu_custom_call.1} parent=1 // pred_check
      _
    $region35: #{tpu_custom_call.1} parent=1 // pred_check_branch
      %68 = sbr.rel (0) target = $region37
    $region36: #{tpu_custom_call.1} parent=1 // pred_region
      _
    $region37: #{tpu_custom_call.1} parent=1 // pred_fallthru
      _
    // Predicated region
    $region38: #{tpu_custom_call.1} parent=1 // pred_check
      _
    $region39: #{tpu_custom_call.1} parent=1 // pred_check_branch
      %70 = sbr.rel (0) target = $region41
    $region40: #{tpu_custom_call.1} parent=1 // pred_region
      %72 = vsyncadd [#allocation9], 0
      %s73 = sshll.u32 %s9, 4
      %s74 = int_to_ptr.hbm [resolvable:$true] %s73
      %s75 = sshll.u32 [#allocation8], 4
      %s76 = int_to_ptr.vmem [resolvable:$true] %s75
      %81 = dma.hbm_to_vmem [thread:$0]  %s74, 2048, %s76, [#allocation9], 128, 128, 8
    $region41: #{tpu_custom_call.1} parent=1 // pred_fallthru
      _
    // Predicated region
    $region42: #{tpu_custom_call.1} parent=1 // pred_check
      _
    $region43: #{tpu_custom_call.1} parent=1 // pred_check_branch
      %83 = sbr.rel (0) target = $region45
    $region44: #{tpu_custom_call.1} parent=1 // pred_region
      _
    $region45: #{tpu_custom_call.1} parent=1 // pred_fallthru
      _
    // Predicated region
    $region46: #{tpu_custom_call.1} parent=1 // pred_check
      _
    $region47: #{tpu_custom_call.1} parent=1 // pred_check_branch
      %85 = sbr.rel (0) target = $region49
    $region48: #{tpu_custom_call.1} parent=1 // pred_region
      %87 = dma.done [#allocation3], 128
    $region49: #{tpu_custom_call.1} parent=1 // pred_fallthru
      _
    // Predicated region
    $region50: #{tpu_custom_call.1} parent=1 // pred_check
      _
    $region51: #{tpu_custom_call.1} parent=1 // pred_check_branch
      %89 = sbr.rel (0) target = $region53
    $region52: #{tpu_custom_call.1} parent=1 // pred_region
      %91 = dma.done [#allocation6], 2048
    $region53: #{tpu_custom_call.1} parent=1 // pred_fallthru
      _
    // Predicated region
    $region54: #{tpu_custom_call.1} parent=1 // pred_check
      _
    $region55: #{tpu_custom_call.1} parent=1 // pred_check_branch
      %93 = sbr.rel (0) target = $region57
    $region56: #{tpu_custom_call.1} parent=1 // pred_region
      %95 = dma.done [#allocation6], 2048
    $region57: #{tpu_custom_call.1} parent=1 // pred_fallthru
      _
    // Predicated region
    $region58: #{tpu_custom_call.1} parent=1 // pred_check
      _
    $region59: #{tpu_custom_call.1} parent=1 // pred_check_branch
      %97 = sbr.rel (0) target = $region61
    $region60: #{tpu_custom_call.1} parent=1 // pred_region
      %99 = dma.done [#allocation9], 2048
    $region61: #{tpu_custom_call.1} parent=1 // pred_fallthru
      _
    %v100 = vld [vmem:[#allocation2] sm:$0xff]
    %v101 = vld [vmem:[#allocation5] sm:$0xff]
    %v102 = vld [vmem:[#allocation5 + $0x8] sm:$0xff]
    %v103 = vld [vmem:[#allocation5 + $0x10] sm:$0xff]
    %v104 = vld [vmem:[#allocation5 + $0x18] sm:$0xff]
    %v105 = vld [vmem:[#allocation5 + $0x20] sm:$0xff]
    %v106 = vld [vmem:[#allocation5 + $0x28] sm:$0xff]
    %v107 = vld [vmem:[#allocation5 + $0x30] sm:$0xff]
    %v108 = vld [vmem:[#allocation5 + $0x38] sm:$0xff]
    %v109 = vld [vmem:[#allocation5 + $0x40] sm:$0xff]
    %v110 = vld [vmem:[#allocation5 + $0x48] sm:$0xff]
    %v111 = vld [vmem:[#allocation5 + $0x50] sm:$0xff]
    %v112 = vld [vmem:[#allocation5 + $0x58] sm:$0xff]
    %v113 = vld [vmem:[#allocation5 + $0x60] sm:$0xff]
    %v114 = vld [vmem:[#allocation5 + $0x68] sm:$0xff]
    %v115 = vld [vmem:[#allocation5 + $0x70] sm:$0xff]
    %v116 = vld [vmem:[#allocation5 + $0x78] sm:$0xff]
    %v117 = vld [vmem:[%s2] sm:$0x1]
    %v119 = vperm.slane %v117, 0
    %121 = vmatpush.msra.mxu0 %v116
    %122 = vmatpush.msra.mxu0 %v115
    %123 = vmatpush.msra.mxu0 %v114
    %124 = vmatpush.msra.mxu0 %v113
    %125 = vmatpush.msra.mxu0 %v112
    %126 = vmatpush.msra.mxu0 %v111
    %127 = vmatpush.msra.mxu0 %v110
    %128 = vmatpush.msra.mxu0 %v109
    %129 = vmatpush.msra.mxu0 %v108
    %130 = vmatpush.msra.mxu0 %v107
    %131 = vmatpush.msra.mxu0 %v106
    %132 = vmatpush.msra.mxu0 %v105
    %133 = vmatpush.msra.mxu0 %v104
    %134 = vmatpush.msra.mxu0 %v103
    %135 = vmatpush.msra.mxu0 %v102
    %136 = vmatpush.msra.mxu0 %v101
    %137 = vmatmul.f32.gmra.mxu0 %v100
    %v138 = vpop.f32.mrf.mxu0
    %v139 = vadd.f32 %v119, %v138
    %140 = vdwg.mxu0
    %v141 = vmax.f32 %v139, 0.0
    %v142 = vrot.slane %v141, 4
    %v143 = vadd.f32 %v141, %v142
    %v144 = vrot.slane %v143, 2
    %v145 = vadd.f32 %v143, %v144
    %v146 = vrot.slane %v145, 1
    %v147 = vadd.f32 %v145, %v146
    %v148 = vrcp.pop 8.0
    %v149 = vmul.f32 8.0, %v148
    %v150 = vsub.f32 1.0, %v149
    %v151 = vmul.f32 %v148, %v150
    %v152 = vadd.f32 %v148, %v151
    %vm153 = vweird.f32 %v148
    %v154 = vsel %vm153, %v148, %v152
    %v155 = vmul.f32 %v147, %v154
    %v156 = vsub.f32 %v141, %v155
    %v157 = vmul.f32 %v156, %v156
    %v158 = vrot.slane %v157, 4
    %v159 = vadd.f32 %v157, %v158
    %v160 = vrot.slane %v159, 2
    %v161 = vadd.f32 %v159, %v160
    %v162 = vrot.slane %v161, 1
    %v163 = vadd.f32 %v161, %v162
    %v164 = vmul.f32 %v163, %v154
    %v165 = vld [vmem:[%s3] sm:$0x1]
    %v166 = vadd.f32 %v164, 1e-05
    %v167 = vrsqrt.pop %v166
    %v168 = vmul.f32 %v167, %v166
    %v169 = vmul.f32 %v168, %v167
    %v170 = vmul.f32 0.5, %v169
    %v171 = vsub.f32 1.5, %v170
    %v172 = vmul.f32 %v167, %v171
    %vm173 = vweird.f32 %v166
    %vm174 = vweird.f32 %v167
    %vm175 = vmor %vm173, %vm174
    %v176 = vsel %vm175, %v167, %v172
    %v177 = vmul.f32 %v165, %v176
    %v179 = vperm.slane %v177, 0
    %v181 = vmul.f32 %v156, %v179
    %v182 = vld [vmem:[%s4] sm:$0x1]
    %v184 = vperm.slane %v182, 0
    %v186 = vadd.f32 %v181, %v184
    %v187 = vld [vmem:[#allocation7] sm:$0xff]
    %v188 = vld [vmem:[#allocation7 + $0x8] sm:$0xff]
    %v189 = vld [vmem:[#allocation7 + $0x10] sm:$0xff]
    %v190 = vld [vmem:[#allocation7 + $0x18] sm:$0xff]
    %v191 = vld [vmem:[#allocation7 + $0x20] sm:$0xff]
    %v192 = vld [vmem:[#allocation7 + $0x28] sm:$0xff]
    %v193 = vld [vmem:[#allocation7 + $0x30] sm:$0xff]
    %v194 = vld [vmem:[#allocation7 + $0x38] sm:$0xff]
    %v195 = vld [vmem:[#allocation7 + $0x40] sm:$0xff]
    %v196 = vld [vmem:[#allocation7 + $0x48] sm:$0xff]
    %v197 = vld [vmem:[#allocation7 + $0x50] sm:$0xff]
    %v198 = vld [vmem:[#allocation7 + $0x58] sm:$0xff]
    %v199 = vld [vmem:[#allocation7 + $0x60] sm:$0xff]
    %v200 = vld [vmem:[#allocation7 + $0x68] sm:$0xff]
    %v201 = vld [vmem:[#allocation7 + $0x70] sm:$0xff]
    %v202 = vld [vmem:[#allocation7 + $0x78] sm:$0xff]
    %v203 = vld [vmem:[%s6] sm:$0x1]
    %v205 = vperm.slane %v203, 0
    %207 = vmatpush.msra.mxu0 %v202
    %208 = vmatpush.msra.mxu0 %v201
    %209 = vmatpush.msra.mxu0 %v200
    %210 = vmatpush.msra.mxu0 %v199
    %211 = vmatpush.msra.mxu0 %v198
    %212 = vmatpush.msra.mxu0 %v197
    %213 = vmatpush.msra.mxu0 %v196
    %214 = vmatpush.msra.mxu0 %v195
    %215 = vmatpush.msra.mxu0 %v194
    %216 = vmatpush.msra.mxu0 %v193
    %217 = vmatpush.msra.mxu0 %v192
    %218 = vmatpush.msra.mxu0 %v191
    %219 = vmatpush.msra.mxu0 %v190
    %220 = vmatpush.msra.mxu0 %v189
    %221 = vmatpush.msra.mxu0 %v188
    %222 = vmatpush.msra.mxu0 %v187
    %223 = vmatmul.f32.gmra.mxu0 %v186
    %v224 = vpop.f32.mrf.mxu0
    %v225 = vadd.f32 %v205, %v224
    %226 = vdwg.mxu0
    %v227 = vmax.f32 %v225, 0.0
    %v228 = vrot.slane %v227, 4
    %v229 = vadd.f32 %v227, %v228
    %v230 = vrot.slane %v229, 2
    %v231 = vadd.f32 %v229, %v230
    %v232 = vrot.slane %v231, 1
    %v233 = vadd.f32 %v231, %v232
    %v234 = vmul.f32 %v233, %v154
    %v235 = vsub.f32 %v227, %v234
    %v236 = vmul.f32 %v235, %v235
    %v237 = vrot.slane %v236, 4
    %v238 = vadd.f32 %v236, %v237
    %v239 = vrot.slane %v238, 2
    %v240 = vadd.f32 %v238, %v239
    %v241 = vrot.slane %v240, 1
    %v242 = vadd.f32 %v240, %v241
    %v243 = vmul.f32 %v242, %v154
    %v244 = vld [vmem:[%s7] sm:$0x1]
    %v245 = vadd.f32 %v243, 1e-05
    %v246 = vrsqrt.pop %v245
    %v247 = vmul.f32 %v246, %v245
    %v248 = vmul.f32 %v247, %v246
    %v249 = vmul.f32 0.5, %v248
    %v250 = vsub.f32 1.5, %v249
    %v251 = vmul.f32 %v246, %v250
    %vm252 = vweird.f32 %v245
    %vm253 = vweird.f32 %v246
    %vm254 = vmor %vm252, %vm253
    %v255 = vsel %vm254, %v246, %v251
    %v256 = vmul.f32 %v244, %v255
    %v258 = vperm.slane %v256, 0
    %v260 = vmul.f32 %v235, %v258
    %v261 = vld [vmem:[%s8] sm:$0x1]
    %v263 = vperm.slane %v261, 0
    %v265 = vadd.f32 %v260, %v263
    %v266 = vld [vmem:[#allocation8] sm:$0xff]
    %v267 = vld [vmem:[#allocation8 + $0x8] sm:$0xff]
    %v268 = vld [vmem:[#allocation8 + $0x10] sm:$0xff]
    %v269 = vld [vmem:[#allocation8 + $0x18] sm:$0xff]
    %v270 = vld [vmem:[#allocation8 + $0x20] sm:$0xff]
    %v271 = vld [vmem:[#allocation8 + $0x28] sm:$0xff]
    %v272 = vld [vmem:[#allocation8 + $0x30] sm:$0xff]
    %v273 = vld [vmem:[#allocation8 + $0x38] sm:$0xff]
    %v274 = vld [vmem:[#allocation8 + $0x40] sm:$0xff]
    %v275 = vld [vmem:[#allocation8 + $0x48] sm:$0xff]
    %v276 = vld [vmem:[#allocation8 + $0x50] sm:$0xff]
    %v277 = vld [vmem:[#allocation8 + $0x58] sm:$0xff]
    %v278 = vld [vmem:[#allocation8 + $0x60] sm:$0xff]
    %v279 = vld [vmem:[#allocation8 + $0x68] sm:$0xff]
    %v280 = vld [vmem:[#allocation8 + $0x70] sm:$0xff]
    %v281 = vld [vmem:[#allocation8 + $0x78] sm:$0xff]
    %v282 = vld [vmem:[%s10] sm:$0x1]
    %v284 = vperm.slane %v282, 0
    %286 = vmatpush.msra.mxu0 %v281
    %287 = vmatpush.msra.mxu0 %v280
    %288 = vmatpush.msra.mxu0 %v279
    %289 = vmatpush.msra.mxu0 %v278
    %290 = vmatpush.msra.mxu0 %v277
    %291 = vmatpush.msra.mxu0 %v276
    %292 = vmatpush.msra.mxu0 %v275
    %293 = vmatpush.msra.mxu0 %v274
    %294 = vmatpush.msra.mxu0 %v273
    %295 = vmatpush.msra.mxu0 %v272
    %296 = vmatpush.msra.mxu0 %v271
    %297 = vmatpush.msra.mxu0 %v270
    %298 = vmatpush.msra.mxu0 %v269
    %299 = vmatpush.msra.mxu0 %v268
    %300 = vmatpush.msra.mxu0 %v267
    %301 = vmatpush.msra.mxu0 %v266
    %302 = vmatmul.f32.gmra.mxu0 %v265
    %v303 = vpop.f32.mrf.mxu0
    %v304 = vadd.f32 %v284, %v303
    %305 = vdwg.mxu0
    %306 = vst [vmem:[#allocation10] sm:$0xff] %v304
    // Predicated region
    $region62: #{tpu_custom_call.1} parent=1 // pred_check
      _
    $region63: #{tpu_custom_call.1} parent=1 // pred_check_branch
      %308 = sbr.rel (0) target = $region65
    $region64: #{tpu_custom_call.1} parent=1 // pred_region
      %310 = vsyncadd [#allocation4], 0
      %s312 = sshll.u32 [#allocation10], 4
      %s313 = int_to_ptr.vmem [resolvable:$true] %s312
      %s314 = sshll.u32 %s11, 4
      %s315 = int_to_ptr.hbm [resolvable:$true] %s314
      %317 = dma.vmem_to_hbm [thread:$0]  %s313, 128, %s315, [#allocation4]
    $region65: #{tpu_custom_call.1} parent=1 // pred_fallthru
      _
    // Predicated region
    $region66: #{tpu_custom_call.1} parent=1 // pred_check
      _
    $region67: #{tpu_custom_call.1} parent=1 // pred_check_branch
      %319 = sbr.rel (0) target = $region69
    $region68: #{tpu_custom_call.1} parent=1 // pred_region
      %321 = dma.done [#allocation4], 128
    $region69: #{tpu_custom_call.1} parent=1 // pred_fallthru
      _
    %322 = vsyncpa [#allocation3], 1
    %323 = vsyncpa [#allocation6], 1
    %324 = vsyncpa [#allocation9], 1
    %325 = vsyncpa [#allocation4], 1

</llo_original>
